<compile_context>
chip_gen: v5e
topology: v5e:2x2
jax: 0.10.0
libtpu: 0.0.40
codegen_flags: <defaults>
</compile_context>

<pallas_src>
import functools

import jax
import jax.numpy as jnp
from jax.experimental import pallas as pl
from jax.experimental.pallas import tpu as pltpu


def _round_up(x, m):
    return ((x + m - 1) // m) * m


# ----------------------------- Pallas kernel ------------------------------ #
def _cnp_kernel(cxy_ref, xt_ref, enc_ref, dec_ref, out_ref, *, dy):
    TB, Nc, DXYP = cxy_ref.shape
    _, Nt, DXP = xt_ref.shape
    LP = enc_ref.shape[1]          # lane-padded latent width (multiple of 128)
    OUTP = out_ref.shape[2]        # lane-padded output width (multiple of 128)
    f32 = jnp.float32

    # Flatten batch tile into the matmul M dim (leading-dim merge only -> free).
    cxy = cxy_ref[...].reshape(TB * Nc, DXYP)       # (TB*Nc, DXYP)
    xt = xt_ref[...].reshape(TB * Nt, DXP)          # (TB*Nt, DXP)

    # ---- Encoder weight views (all segment starts are multiples of 8 -> aligned) ----
    o = 0
    w1 = enc_ref[o:o + DXYP, :]; o += DXYP
    b1 = enc_ref[o:o + 1, :];    o += 8
    w2 = enc_ref[o:o + LP, :];   o += LP
    b2 = enc_ref[o:o + 1, :];    o += 8
    w3 = enc_ref[o:o + LP, :];   o += LP
    b3 = enc_ref[o:o + 1, :]

    # ---- Encoder pre-pooling MLP: Linear -> ReLU -> Linear -> ReLU -> Linear ----
    h = jnp.dot(cxy, w1, preferred_element_type=f32) + b1
    h = jnp.maximum(h, 0.0)
    h = jnp.maximum(jnp.dot(h, w2, preferred_element_type=f32) + b2, 0.0)
    h = jnp.dot(h, w3, preferred_element_type=f32) + b3          # (TB*Nc, LP)

    # ---- MeanPooling over context points: cross-sublane (XLU) reduce, Nc deep ----
    r = h.reshape(TB, Nc, LP).sum(axis=1) * (1.0 / Nc)           # (TB, LP)

    # ---- Decoder weight views ----
    o = 0
    v1x = dec_ref[o:o + DXP, :LP];  o += DXP
    v1r = dec_ref[o:o + LP, :LP];   o += LP
    c1 = dec_ref[o:o + 1, :LP];     o += 8
    v2 = dec_ref[o:o + LP, :LP];    o += LP
    c2 = dec_ref[o:o + 1, :LP];     o += 8
    v3 = dec_ref[o:o + LP, :OUTP];  o += LP
    c3 = dec_ref[o:o + 1, :OUTP]

    # ---- Decoder post-pooling MLP on concat([x_target, r_repeated], -1) ----
    # (split matmul avoids an in-kernel lane concat; r broadcast over Nt sublanes)
    zx = jnp.dot(xt, v1x, preferred_element_type=f32)            # (TB*Nt, LP)
    zr = jnp.dot(r, v1r, preferred_element_type=f32)             # (TB, LP)
    z = zx.reshape(TB, Nt, LP) + zr[:, None, :] + c1[None]
    z = jnp.maximum(z, 0.0).reshape(TB * Nt, LP)
    z = jnp.maximum(jnp.dot(z, v2, preferred_element_type=f32) + c2, 0.0)
    z = jnp.dot(z, v3, preferred_element_type=f32) + c3          # (TB*Nt, OUTP)

    # Numerically stable softplus applied only to columns >= dy (sigma half).
    col = jax.lax.broadcasted_iota(jnp.int32, z.shape, dimension=1)
    sp = jnp.maximum(z, 0.0) + jnp.log1p(jnp.exp(-jnp.abs(z)))
    out = jnp.where(col < dy, z, sp)

    # Lane-dense, unmasked store: last dim is a multiple of 128.
    out_ref[...] = out.reshape(TB, Nt, OUTP).astype(out_ref.dtype)


# -------------------------- Parameter packing ------------------------------ #
def _pack_params(params, dx, dy, L):
    """Pack the weights into 2 row-stacked arrays with 8-row / 128-lane aligned
    segments. Zero padding propagates zeros through ReLU, so results are unchanged."""
    LP = _round_up(L, 128)
    DXYP = _round_up(dx + dy, 8)
    DXP = _round_up(dx, 8)
    OUTP = _round_up(2 * dy, 128)
    WD = max(LP, OUTP)

    def seg(a, rows, cols):
        blk = jnp.zeros((rows, cols), jnp.float32)
        return blk.at[: a.shape[0], : a.shape[1]].set(a.astype(jnp.float32))

    w1 = jnp.concatenate([params["w1x"], params["w1y"]], axis=0)   # (dx+dy, L)
    enc = jnp.concatenate(
        [seg(w1, DXYP, LP), seg(params["b1"], 8, LP),
         seg(params["w2"], LP, LP), seg(params["b2"], 8, LP),
         seg(params["w3"], LP, LP), seg(params["b3"], 8, LP)], axis=0)

    dec = jnp.concatenate(
        [seg(params["v1x"], DXP, WD), seg(params["v1r"], LP, WD), seg(params["c1"], 8, WD),
         seg(params["v2"], LP, WD), seg(params["c2"], 8, WD),
         seg(params["v3"], LP, WD), seg(params["c3"], 8, WD)], axis=0)

    dims = dict(LP=LP, DXYP=DXYP, DXP=DXP, OUTP=OUTP, WD=WD)
    return enc, dec, dims


# ------------------------------- Wrapper ----------------------------------- #
def cnp_forward(x_context, y_context, x_target, params, *, tb=8):
    """Runs the fused CNP forward pass.  Returns (mean, sigma).

    Note: for production batch sizes, raise `tb` so tb*Nc / tb*Nt are multiples of
    128 (v5e) or 256 (v6e/v7x) and each core gets >= 4 grid steps; per-task VMEM
    footprint is only a few KB so tb in the hundreds is fine.
    """
    B, Nc, dx = x_context.shape
    _, _, dy = y_context.shape
    _, Nt, _ = x_target.shape
    L = params["w2"].shape[0]

    enc, dec, dims = _pack_params(params, dx, dy, L)
    DXYP, DXP, OUTP = dims["DXYP"], dims["DXP"], dims["OUTP"]

    # Merge x|y context into one operand; zero-pad feature dims to sublane multiples
    # (padding matches the zero-padded weight rows -> identical math).
    cxy = jnp.concatenate([x_context, y_context], axis=-1).astype(jnp.float32)
    cxy = jnp.pad(cxy, ((0, 0), (0, 0), (0, DXYP - (dx + dy))))
    xt = jnp.pad(x_target.astype(jnp.float32), ((0, 0), (0, 0), (0, DXP - dx)))

    # Pad the batch to a multiple of the batch tile; padded tasks are discarded.
    Bp = _round_up(B, tb)
    if Bp != B:
        cxy = jnp.pad(cxy, ((0, Bp - B), (0, 0), (0, 0)))
        xt = jnp.pad(xt, ((0, Bp - B), (0, 0), (0, 0)))
    grid = (Bp // tb,)

    kernel = functools.partial(_cnp_kernel, dy=dy)

    out = pl.pallas_call(
        kernel,
        out_shape=jax.ShapeDtypeStruct((Bp, Nt, OUTP), jnp.float32),
        grid_spec=pltpu.PrefetchScalarGridSpec(
            num_scalar_prefetch=0,
            grid=grid,
            in_specs=[
                pl.BlockSpec((tb, Nc, DXYP), lambda b: (b, 0, 0)),
                pl.BlockSpec((tb, Nt, DXP), lambda b: (b, 0, 0)),
                pl.BlockSpec(enc.shape, lambda b: (0, 0)),
                pl.BlockSpec(dec.shape, lambda b: (0, 0)),
            ],
            out_specs=pl.BlockSpec((tb, Nt, OUTP), lambda b: (b, 0, 0)),
        ),
        compiler_params=pltpu.CompilerParams(
            dimension_semantics=("parallel",)),
    )(cxy, xt, enc, dec)

    out = out[:B]
    return out[..., :dy], out[..., dy:2 * dy]


# -------------------------- Parameter construction ------------------------- #
def init_params(key, input_dim, latent_dim, num_channels):
    """Deterministic synthetic weights (shapes match the PyTorch module)."""
    dx, L, dy = input_dim, latent_dim, num_channels
    keys = jax.random.split(key, 12)

    def lin(k, fan_in, fan_out):
        scale = 1.0 / jnp.sqrt(jnp.float32(fan_in))
        return scale * jax.random.normal(k, (fan_in, fan_out), jnp.float32)

    # Encoder pre_pooling_fn: (dx+dy) -> L -> L -> L
    w1 = lin(keys[0], dx + dy, L)
    params = dict(
        w1x=w1[:dx], w1y=w1[dx:],
        b1=0.01 * jax.random.normal(keys[1], (1, L), jnp.float32),
        w2=lin(keys[2], L, L),
        b2=0.01 * jax.random.normal(keys[3], (1, L), jnp.float32),
        w3=lin(keys[4], L, L),
        b3=0.01 * jax.random.normal(keys[5], (1, L), jnp.float32),
    )
    # Decoder post_pooling_fn: (L+dx) -> L -> L -> 2*dy
    v1 = lin(keys[6], L + dx, L)
    params.update(
        v1x=v1[:dx], v1r=v1[dx:],
        c1=0.01 * jax.random.normal(keys[7], (1, L), jnp.float32),
        v2=lin(keys[8], L, L),
        c2=0.01 * jax.random.normal(keys[9], (1, L), jnp.float32),
        v3=lin(keys[10], L, 2 * dy),
        c3=0.01 * jax.random.normal(keys[11], (1, 2 * dy), jnp.float32),
    )
    return params


# ---------------------------- Plain-JAX reference --------------------------- #
def cnp_reference(x_context, y_context, x_target, params):
    dy = y_context.shape[-1]
    inp = jnp.concatenate([x_context, y_context], axis=-1)
    w1 = jnp.concatenate([params["w1x"], params["w1y"]], axis=0)
    h = jax.nn.relu(inp @ w1 + params["b1"])
    h = jax.nn.relu(h @ params["w2"] + params["b2"])
    h = h @ params["w3"] + params["b3"]
    r = jnp.mean(h, axis=1, keepdims=True)                       # (B, 1, L)
    r = jnp.broadcast_to(r, (x_target.shape[0], x_target.shape[1], r.shape[-1]))
    z = jnp.concatenate([x_target, r], axis=-1)
    v1 = jnp.concatenate([params["v1x"], params["v1r"]], axis=0)
    z = jax.nn.relu(z @ v1 + params["c1"])
    z = jax.nn.relu(z @ params["v2"] + params["c2"])
    z = z @ params["v3"] + params["c3"]
    return z[..., :dy], jax.nn.softplus(z[..., dy:])


# ----------------------------------- Main ----------------------------------- #
if __name__ == "__main__":
    input_dim, latent_dim, num_channels = 2, 32, 3
    B, Nc, Nt = 32, 8, 16   # tb=8 -> grid length 4 (software pipelining; both v7x TCs busy)

    key = jax.random.PRNGKey(0)
    k_xc, k_yc, k_xt, k_p = jax.random.split(key, 4)
    x_context = jax.random.normal(k_xc, (B, Nc, input_dim), jnp.float32)
    y_context = jax.random.normal(k_yc, (B, Nc, num_channels), jnp.float32)
    x_target = jax.random.normal(k_xt, (B, Nt, input_dim), jnp.float32)
    params = init_params(k_p, input_dim, latent_dim, num_channels)

    mean, sigma = cnp_forward(x_context, y_context, x_target, params, tb=8)
    jax.block_until_ready((mean, sigma))

    mean_ref, sigma_ref = cnp_reference(x_context, y_context, x_target, params)
    assert mean.shape == (B, Nt, num_channels) and sigma.shape == (B, Nt, num_channels)
    assert jnp.allclose(mean, mean_ref, atol=1e-5, rtol=1e-5)
    assert jnp.allclose(sigma, sigma_ref, atol=1e-5, rtol=1e-5)

    print("KERNEL_OK")
</pallas_src>

<mosaic_0001>
module attributes {stable_mosaic.version = 11 : i64} {
  func.func @_cnp_kernel(%arg0: i32, %arg1: memref<8x8x8xf32, #tpu.memory_space<vmem>>, %arg2: memref<8x16x8xf32, #tpu.memory_space<vmem>>, %arg3: memref<288x128xf32, #tpu.memory_space<vmem>>, %arg4: memref<416x128xf32, #tpu.memory_space<vmem>>, %arg5: memref<8x16x128xf32, #tpu.memory_space<vmem>>) attributes {dimension_semantics = [#tpu.dimension_semantics<parallel>], iteration_bounds = array<i64: 4>, scalar_prefetch = 0 : i64, scratch_operands = 0 : i64, tpu.core_type = #tpu.core_type<tc>, window_params = [{transform_indices = @transform_0, window_bounds = array<i64: 8, 8, 8>}, {transform_indices = @transform_1, window_bounds = array<i64: 8, 16, 8>}, {pipeline_mode = #tpu.pipeline_mode<synchronous>, transform_indices = @transform_2, window_bounds = array<i64: 288, 128>}, {pipeline_mode = #tpu.pipeline_mode<synchronous>, transform_indices = @transform_3, window_bounds = array<i64: 416, 128>}, {transform_indices = @transform_4, window_bounds = array<i64: 8, 16, 128>}]} {
    %c0 = arith.constant 0 : index
    %c0_0 = arith.constant 0 : index
    %c0_1 = arith.constant 0 : index
    %0 = vector.load %arg1[%c0, %c0_0, %c0_1] : memref<8x8x8xf32, #tpu.memory_space<vmem>>, vector<8x8x8xf32>
    %1 = vector.shape_cast %0 : vector<8x8x8xf32> to vector<64x8xf32>
    %c0_2 = arith.constant 0 : index
    %c0_3 = arith.constant 0 : index
    %c0_4 = arith.constant 0 : index
    %2 = vector.load %arg2[%c0_2, %c0_3, %c0_4] : memref<8x16x8xf32, #tpu.memory_space<vmem>>, vector<8x16x8xf32>
    %3 = vector.shape_cast %2 : vector<8x16x8xf32> to vector<128x8xf32>
    %c0_5 = arith.constant 0 : index
    %c0_6 = arith.constant 0 : index
    %4 = vector.load %arg3[%c0_5, %c0_6] : memref<288x128xf32, #tpu.memory_space<vmem>>, vector<8x128xf32>
    %c8 = arith.constant 8 : index
    %c0_7 = arith.constant 0 : index
    %5 = vector.load %arg3[%c8, %c0_7] : memref<288x128xf32, #tpu.memory_space<vmem>>, vector<1x128xf32>
    %c16 = arith.constant 16 : index
    %c0_8 = arith.constant 0 : index
    %6 = vector.load %arg3[%c16, %c0_8] : memref<288x128xf32, #tpu.memory_space<vmem>>, vector<128x128xf32>
    %c144 = arith.constant 144 : index
    %c0_9 = arith.constant 0 : index
    %7 = vector.load %arg3[%c144, %c0_9] : memref<288x128xf32, #tpu.memory_space<vmem>>, vector<1x128xf32>
    %c152 = arith.constant 152 : index
    %c0_10 = arith.constant 0 : index
    %8 = vector.load %arg3[%c152, %c0_10] : memref<288x128xf32, #tpu.memory_space<vmem>>, vector<128x128xf32>
    %c280 = arith.constant 280 : index
    %c0_11 = arith.constant 0 : index
    %9 = vector.load %arg3[%c280, %c0_11] : memref<288x128xf32, #tpu.memory_space<vmem>>, vector<1x128xf32>
    %cst = arith.constant dense<0.000000e+00> : vector<64x128xf32>
    %10 = tpu.matmul %1, %4, %cst {dimension_numbers = #tpu.dot_dimension_numbers<[1], [0], [0], [1], [0, 0, 1, 1], [], []>} : vector<64x8xf32>, vector<8x128xf32>, vector<64x128xf32> -> vector<64x128xf32>
    %11 = vector.broadcast %5 : vector<1x128xf32> to vector<64x128xf32>
    %12 = arith.addf %10, %11 : vector<64x128xf32>
    %cst_12 = arith.constant 0.000000e+00 : f32
    %13 = vector.broadcast %cst_12 : f32 to vector<64x128xf32>
    %14 = arith.maximumf %12, %13 : vector<64x128xf32>
    %cst_13 = arith.constant dense<0.000000e+00> : vector<64x128xf32>
    %15 = tpu.matmul %14, %6, %cst_13 {dimension_numbers = #tpu.dot_dimension_numbers<[1], [0], [0], [1], [0, 0, 1, 1], [], []>} : vector<64x128xf32>, vector<128x128xf32>, vector<64x128xf32> -> vector<64x128xf32>
    %16 = vector.broadcast %7 : vector<1x128xf32> to vector<64x128xf32>
    %17 = arith.addf %15, %16 : vector<64x128xf32>
    %cst_14 = arith.constant 0.000000e+00 : f32
    %18 = vector.broadcast %cst_14 : f32 to vector<64x128xf32>
    %19 = arith.maximumf %17, %18 : vector<64x128xf32>
    %cst_15 = arith.constant dense<0.000000e+00> : vector<64x128xf32>
    %20 = tpu.matmul %19, %8, %cst_15 {dimension_numbers = #tpu.dot_dimension_numbers<[1], [0], [0], [1], [0, 0, 1, 1], [], []>} : vector<64x128xf32>, vector<128x128xf32>, vector<64x128xf32> -> vector<64x128xf32>
    %21 = vector.broadcast %9 : vector<1x128xf32> to vector<64x128xf32>
    %22 = arith.addf %20, %21 : vector<64x128xf32>
    %23 = vector.shape_cast %22 : vector<64x128xf32> to vector<8x8x128xf32>
    %cst_16 = arith.constant dense<0.000000e+00> : vector<8x128xf32>
    %24 = vector.multi_reduction <add>, %23, %cst_16 [1] : vector<8x8x128xf32> to vector<8x128xf32>
    %cst_17 = arith.constant 1.250000e-01 : f32
    %25 = vector.broadcast %cst_17 : f32 to vector<8x128xf32>
    %26 = arith.mulf %24, %25 : vector<8x128xf32>
    %c0_18 = arith.constant 0 : index
    %c0_19 = arith.constant 0 : index
    %27 = vector.load %arg4[%c0_18, %c0_19] : memref<416x128xf32, #tpu.memory_space<vmem>>, vector<8x128xf32>
    %c8_20 = arith.constant 8 : index
    %c0_21 = arith.constant 0 : index
    %28 = vector.load %arg4[%c8_20, %c0_21] : memref<416x128xf32, #tpu.memory_space<vmem>>, vector<128x128xf32>
    %c136 = arith.constant 136 : index
    %c0_22 = arith.constant 0 : index
    %29 = vector.load %arg4[%c136, %c0_22] : memref<416x128xf32, #tpu.memory_space<vmem>>, vector<1x128xf32>
    %c144_23 = arith.constant 144 : index
    %c0_24 = arith.constant 0 : index
    %30 = vector.load %arg4[%c144_23, %c0_24] : memref<416x128xf32, #tpu.memory_space<vmem>>, vector<128x128xf32>
    %c272 = arith.constant 272 : index
    %c0_25 = arith.constant 0 : index
    %31 = vector.load %arg4[%c272, %c0_25] : memref<416x128xf32, #tpu.memory_space<vmem>>, vector<1x128xf32>
    %c280_26 = arith.constant 280 : index
    %c0_27 = arith.constant 0 : index
    %32 = vector.load %arg4[%c280_26, %c0_27] : memref<416x128xf32, #tpu.memory_space<vmem>>, vector<128x128xf32>
    %c408 = arith.constant 408 : index
    %c0_28 = arith.constant 0 : index
    %33 = vector.load %arg4[%c408, %c0_28] : memref<416x128xf32, #tpu.memory_space<vmem>>, vector<1x128xf32>
    %cst_29 = arith.constant dense<0.000000e+00> : vector<128x128xf32>
    %34 = tpu.matmul %3, %27, %cst_29 {dimension_numbers = #tpu.dot_dimension_numbers<[1], [0], [0], [1], [0, 0, 1, 1], [], []>} : vector<128x8xf32>, vector<8x128xf32>, vector<128x128xf32> -> vector<128x128xf32>
    %cst_30 = arith.constant dense<0.000000e+00> : vector<8x128xf32>
    %35 = tpu.matmul %26, %28, %cst_30 {dimension_numbers = #tpu.dot_dimension_numbers<[1], [0], [0], [1], [0, 0, 1, 1], [], []>} : vector<8x128xf32>, vector<128x128xf32>, vector<8x128xf32> -> vector<8x128xf32>
    %36 = vector.shape_cast %34 : vector<128x128xf32> to vector<8x16x128xf32>
    %37 = vector.shape_cast %35 : vector<8x128xf32> to vector<8x1x128xf32>
    %38 = vector.broadcast %37 : vector<8x1x128xf32> to vector<8x16x128xf32>
    %39 = arith.addf %36, %38 : vector<8x16x128xf32>
    %40 = vector.shape_cast %29 : vector<1x128xf32> to vector<1x1x128xf32>
    %41 = vector.broadcast %40 : vector<1x1x128xf32> to vector<8x16x128xf32>
    %42 = arith.addf %39, %41 : vector<8x16x128xf32>
    %cst_31 = arith.constant 0.000000e+00 : f32
    %43 = vector.broadcast %cst_31 : f32 to vector<8x16x128xf32>
    %44 = arith.maximumf %42, %43 : vector<8x16x128xf32>
    %45 = vector.shape_cast %44 : vector<8x16x128xf32> to vector<128x128xf32>
    %cst_32 = arith.constant dense<0.000000e+00> : vector<128x128xf32>
    %46 = tpu.matmul %45, %30, %cst_32 {dimension_numbers = #tpu.dot_dimension_numbers<[1], [0], [0], [1], [0, 0, 1, 1], [], []>} : vector<128x128xf32>, vector<128x128xf32>, vector<128x128xf32> -> vector<128x128xf32>
    %47 = vector.broadcast %31 : vector<1x128xf32> to vector<128x128xf32>
    %48 = arith.addf %46, %47 : vector<128x128xf32>
    %cst_33 = arith.constant 0.000000e+00 : f32
    %49 = vector.broadcast %cst_33 : f32 to vector<128x128xf32>
    %50 = arith.maximumf %48, %49 : vector<128x128xf32>
    %cst_34 = arith.constant dense<0.000000e+00> : vector<128x128xf32>
    %51 = tpu.matmul %50, %32, %cst_34 {dimension_numbers = #tpu.dot_dimension_numbers<[1], [0], [0], [1], [0, 0, 1, 1], [], []>} : vector<128x128xf32>, vector<128x128xf32>, vector<128x128xf32> -> vector<128x128xf32>
    %52 = vector.broadcast %33 : vector<1x128xf32> to vector<128x128xf32>
    %53 = arith.addf %51, %52 : vector<128x128xf32>
    %54 = tpu.iota {dimensions = array<i32: 1>} : vector<128x128xi32>
    %cst_35 = arith.constant 0.000000e+00 : f32
    %55 = vector.broadcast %cst_35 : f32 to vector<128x128xf32>
    %56 = arith.maximumf %53, %55 : vector<128x128xf32>
    %57 = math.absf %53 : vector<128x128xf32>
    %cst_36 = arith.constant 0.000000e+00 : f32
    %58 = vector.broadcast %cst_36 : f32 to vector<128x128xf32>
    %59 = arith.subf %58, %57 : vector<128x128xf32>
    %60 = math.exp %59 : vector<128x128xf32>
    %61 = math.log1p %60 : vector<128x128xf32>
    %62 = arith.addf %56, %61 : vector<128x128xf32>
    %c3_i32 = arith.constant 3 : i32
    %63 = vector.broadcast %c3_i32 : i32 to vector<128x128xi32>
    %64 = arith.cmpi slt, %54, %63 : vector<128x128xi32>
    %65 = arith.select %64, %53, %62 : vector<128x128xi1>, vector<128x128xf32>
    %66 = vector.shape_cast %65 : vector<128x128xf32> to vector<8x16x128xf32>
    %c0_37 = arith.constant 0 : index
    %c0_38 = arith.constant 0 : index
    %c0_39 = arith.constant 0 : index
    %67 = vector.load %arg5[%c0_37, %c0_38, %c0_39] : memref<8x16x128xf32, #tpu.memory_space<vmem>>, vector<8x16x128xf32>
    tpu.vector_store %arg5[%c0_37, %c0_38, %c0_39], %66 {strides = array<i32>} : memref<8x16x128xf32, #tpu.memory_space<vmem>>, vector<8x16x128xf32>,
    return
  }
  func.func @transform_0(%arg0: i32) -> (i32, i32, i32) {
    %c0_i32 = arith.constant 0 : i32
    %c0_i32_0 = arith.constant 0 : i32
    %c0_i32_1 = arith.constant 0 : i32
    return %arg0, %c0_i32, %c0_i32_0 : i32, i32, i32
  }
  func.func @transform_1(%arg0: i32) -> (i32, i32, i32) {
    %c0_i32 = arith.constant 0 : i32
    %c0_i32_0 = arith.constant 0 : i32
    %c0_i32_1 = arith.constant 0 : i32
    return %arg0, %c0_i32, %c0_i32_0 : i32, i32, i32
  }
  func.func @transform_2(%arg0: i32) -> (i32, i32) {
    %c0_i32 = arith.constant 0 : i32
    %c0_i32_0 = arith.constant 0 : i32
    %c0_i32_1 = arith.constant 0 : i32
    return %c0_i32, %c0_i32_0 : i32, i32
  }
  func.func @transform_3(%arg0: i32) -> (i32, i32) {
    %c0_i32 = arith.constant 0 : i32
    %c0_i32_0 = arith.constant 0 : i32
    %c0_i32_1 = arith.constant 0 : i32
    return %c0_i32, %c0_i32_0 : i32, i32
  }
  func.func @transform_4(%arg0: i32) -> (i32, i32, i32) {
    %c0_i32 = arith.constant 0 : i32
    %c0_i32_0 = arith.constant 0 : i32
    %c0_i32_1 = arith.constant 0 : i32
    return %arg0, %c0_i32, %c0_i32_0 : i32, i32, i32
  }
}

</mosaic_0001>

<llo_original>
// kernel: tpu_custom_call.1
$region0: #{tpu_custom_call.1}
  #allocation0 [shape = 'u32[]', space=smem, size = 0x4, offset = 0x4, fixed_abs, tag = 'smem constant byte address 0x4 - core index']
  #allocation1 [shape = 'u32[72,128]{1,0:T(1,128)}', space=vmem, size = 0x9000, scoped, tag = 'internal scratch']
  %s0 = inlined_call_operand.vmem [shape: f32[32,8,8], index: 0, kind: input, shape index: {}]
  %s1 = inlined_call_operand.vmem [shape: f32[32,16,8], index: 1, kind: input, shape index: {}]
  %s2 = inlined_call_operand.vmem [shape: f32[288,128], index: 2, kind: input, shape index: {}]
  %s3 = inlined_call_operand.vmem [shape: f32[416,128], index: 3, kind: input, shape index: {}]
  %s4 = inlined_call_operand.hbm [shape: f32[32,16,128], index: 4, kind: output, shape index: {}]
  %s5 = sld [smem:[#allocation0]]
  $region49: #{tpu_custom_call.1} parent=0
    _
  %s7 = ssub.s32 1, %s5
  %s8 = scalar_select 0, %s7, %s5
  $region1: #{tpu_custom_call.1} parent=0
    #allocation2 [shape = 'u8[131072]{0}', space=vmem, size = 0x20000, scoped, tag = 'output window, operand 0']
    #allocation3 [shape = 's32[2]{0}', space=sflag, size = 0x8, scoped, tag = 'scoped memory for tpu_custom_call.1']
    %9 = vsyncpa [#allocation3], 0
    %s10 = scalar_lea.sflag [#allocation3], 1
    %11 = vsyncpa %s10, 0
    loop: start=0, step=1, limit=6
    $region2: #{tpu_custom_call.1} parent=1 // loop_pre_header
      _
    $region3: #{tpu_custom_call.1} parent=1 // loop_header
      %s13 = sphi 0, %s17
      %p14 = scmp.ge.s32.totalorder %s13, 6
      %s23 = sphi 0, %s25
      %s26 = sphi 0, %s23
      %s27 = sphi 0, %s26
      %s43 = sphi 0, %s27
      %s49 = sphi 0, %s51
      %s52 = sphi 0, %s49
      %s53 = sphi 0, %s52
      %s69 = sphi 0, %s53
      %s73 = sphi 0, %s73
      %s75 = sphi 0, %s73
      %s76 = sphi 0, %s75
      %s90 = sphi 0, %s76
      %s94 = sphi 0, %s94
      %s96 = sphi 0, %s94
      %s97 = sphi 0, %s96
      %s111 = sphi 0, %s97
      %s117 = sphi 0, %s119
      %s120 = sphi 0, %s117
      %s121 = sphi 0, %s120
      %s137 = sphi 0, %s121
    $region4: #{tpu_custom_call.1} parent=1 // loop_header_branch
      %16 = sbr.rel (%p14) target = $region8
    $region5: #{tpu_custom_call.1} parent=1 // loop_body
      %s18 = ssub.s32 %s13, 1
      %s19 = ssub.s32 %s13, 2
      %s20 = sadd.s32 %s13, 1
      %s21 = ssub.s32 %s13, %s20
      %p22 = scmp.eq.s32.totalorder %s21, 0
      %s24 = sadd.s32 %s23, 1
      %s25 = scalar_select %p22, %s23, %s24
      %p28 = pneg %p22
      %p29 = scmp.eq.s32.totalorder %s13, 3
      %p30 = por %p28, %p29
      %p31 = scmp.ne.s32.totalorder %s23, %s26
      %p32 = scmp.eq.s32.totalorder %s13, 0
      %p33 = por %p31, %p32
      %p34 = scmp.ne.s32.totalorder %s23, %s26
      %p35 = scmp.eq.s32.totalorder %s18, 3
      %p36 = por %p34, %p35
      %p37 = scmp.ne.s32.totalorder %s26, %s27
      %p38 = scmp.eq.s32.totalorder %s18, 0
      %p39 = por %p37, %p38
      %p40 = scmp.ne.s32.totalorder %s26, %s27
      %p41 = scmp.eq.s32.totalorder %s19, 3
      %p42 = por %p40, %p41
      %p44 = scmp.ne.s32.totalorder %s27, %s43
      %p45 = scmp.eq.s32.totalorder %s19, 0
      %p46 = por %p44, %p45
      %s47 = ssub.s32 %s13, %s20
      %p48 = scmp.eq.s32.totalorder %s47, 0
      %s50 = sadd.s32 %s49, 1
      %s51 = scalar_select %p48, %s49, %s50
      %p54 = pneg %p48
      %p55 = scmp.eq.s32.totalorder %s13, 3
      %p56 = por %p54, %p55
      %p57 = scmp.ne.s32.totalorder %s49, %s52
      %p58 = scmp.eq.s32.totalorder %s13, 0
      %p59 = por %p57, %p58
      %p60 = scmp.ne.s32.totalorder %s49, %s52
      %p61 = scmp.eq.s32.totalorder %s18, 3
      %p62 = por %p60, %p61
      %p63 = scmp.ne.s32.totalorder %s52, %s53
      %p64 = scmp.eq.s32.totalorder %s18, 0
      %p65 = por %p63, %p64
      %p66 = scmp.ne.s32.totalorder %s52, %s53
      %p67 = scmp.eq.s32.totalorder %s19, 3
      %p68 = por %p66, %p67
      %p70 = scmp.ne.s32.totalorder %s53, %s69
      %p71 = scmp.eq.s32.totalorder %s19, 0
      %p72 = por %p70, %p71
      %s74 = sadd.s32 %s73, 1
      %p77 = scmp.eq.s32.totalorder %s13, 3
      %p78 = scmp.ne.s32.totalorder %s73, %s75
      %p79 = scmp.eq.s32.totalorder %s13, 0
      %p80 = por %p78, %p79
      %p81 = scmp.ne.s32.totalorder %s73, %s75
      %p82 = scmp.eq.s32.totalorder %s18, 3
      %p83 = por %p81, %p82
      %p84 = scmp.ne.s32.totalorder %s75, %s76
      %p85 = scmp.eq.s32.totalorder %s18, 0
      %p86 = por %p84, %p85
      %p87 = scmp.ne.s32.totalorder %s75, %s76
      %p88 = scmp.eq.s32.totalorder %s19, 3
      %p89 = por %p87, %p88
      %p91 = scmp.ne.s32.totalorder %s76, %s90
      %p92 = scmp.eq.s32.totalorder %s19, 0
      %p93 = por %p91, %p92
      %s95 = sadd.s32 %s94, 1
      %p98 = scmp.eq.s32.totalorder %s13, 3
      %p99 = scmp.ne.s32.totalorder %s94, %s96
      %p100 = scmp.eq.s32.totalorder %s13, 0
      %p101 = por %p99, %p100
      %p102 = scmp.ne.s32.totalorder %s94, %s96
      %p103 = scmp.eq.s32.totalorder %s18, 3
      %p104 = por %p102, %p103
      %p105 = scmp.ne.s32.totalorder %s96, %s97
      %p106 = scmp.eq.s32.totalorder %s18, 0
      %p107 = por %p105, %p106
      %p108 = scmp.ne.s32.totalorder %s96, %s97
      %p109 = scmp.eq.s32.totalorder %s19, 3
      %p110 = por %p108, %p109
      %p112 = scmp.ne.s32.totalorder %s97, %s111
      %p113 = scmp.eq.s32.totalorder %s19, 0
      %p114 = por %p112, %p113
      %s115 = ssub.s32 %s13, %s20
      %p116 = scmp.eq.s32.totalorder %s115, 0
      %s118 = sadd.s32 %s117, 1
      %s119 = scalar_select %p116, %s117, %s118
      %p122 = pneg %p116
      %p123 = scmp.eq.s32.totalorder %s13, 3
      %p124 = por %p122, %p123
      %p125 = scmp.ne.s32.totalorder %s117, %s120
      %p126 = scmp.eq.s32.totalorder %s13, 0
      %p127 = por %p125, %p126
      %p128 = scmp.ne.s32.totalorder %s117, %s120
      %p129 = scmp.eq.s32.totalorder %s18, 3
      %p130 = por %p128, %p129
      %p131 = scmp.ne.s32.totalorder %s120, %s121
      %p132 = scmp.eq.s32.totalorder %s18, 0
      %p133 = por %p131, %p132
      %p134 = scmp.ne.s32.totalorder %s120, %s121
      %p135 = scmp.eq.s32.totalorder %s19, 3
      %p136 = por %p134, %p135
      %p138 = scmp.ne.s32.totalorder %s121, %s137
      %p139 = scmp.eq.s32.totalorder %s19, 0
      %p140 = por %p138, %p139
      %p141 = scmp.le.s32.totalorder 1, %s13
      %p142 = scmp.lt.s32.totalorder %s13, 5
      %p143 = pnand %p141, %p142
      %p144 = pneg %p143
      // Predicated region
      $region9: #{tpu_custom_call.1} parent=5 // pred_check
        _
      $region10: #{tpu_custom_call.1} parent=5 // pred_check_branch
        %146 = sbr.rel (%p143) target = $region12
      $region11: #{tpu_custom_call.1} parent=5 // pred_region
        %s147 = ssub.s32 %s13, 1
        // Predicated region
        $region13: #{tpu_custom_call.1} parent=11 // pred_check
          %p148 = pneg %p86
        $region14: #{tpu_custom_call.1} parent=11 // pred_check_branch
          %150 = sbr.rel (%p148) target = $region16
        $region15: #{tpu_custom_call.1} parent=11 // pred_region
          _
        $region16: #{tpu_custom_call.1} parent=11 // pred_fallthru
          _
        // Predicated region
        $region17: #{tpu_custom_call.1} parent=11 // pred_check
          %p151 = pneg %p107
        $region18: #{tpu_custom_call.1} parent=11 // pred_check_branch
          %153 = sbr.rel (%p151) target = $region20
        $region19: #{tpu_custom_call.1} parent=11 // pred_region
          _
        $region20: #{tpu_custom_call.1} parent=11 // pred_fallthru
          _
      $region12: #{tpu_custom_call.1} parent=5 // pred_fallthru
        _
      %p154 = scmp.lt.s32.totalorder %s13, 4
      // Predicated region
      $region21: #{tpu_custom_call.1} parent=5 // pred_check
        %p155 = pneg %p154
      $region22: #{tpu_custom_call.1} parent=5 // pred_check_branch
        %157 = sbr.rel (%p155) target = $region24
      $region23: #{tpu_custom_call.1} parent=5 // pred_region
        // Predicated region
        $region25: #{tpu_custom_call.1} parent=23 // pred_check
          %p158 = pneg %p33
        $region26: #{tpu_custom_call.1} parent=23 // pred_check_branch
          %160 = sbr.rel (%p158) target = $region28
        $region27: #{tpu_custom_call.1} parent=23 // pred_region
          %s161 = smul.u32 8, %s13
          %p162 = scmp.lt.s32.totalorder %s161, 31
          %s163 = scalar_select %p162, %s161, 31
          %s164 = smul.addr %s163, 8
          %s165 = scalar_lea.vmem %s0, %s164
          %s166 = smul.u32 8, %s13
        $region28: #{tpu_custom_call.1} parent=23 // pred_fallthru
          _
        // Predicated region
        $region29: #{tpu_custom_call.1} parent=23 // pred_check
          %p167 = pneg %p59
        $region30: #{tpu_custom_call.1} parent=23 // pred_check_branch
          %169 = sbr.rel (%p167) target = $region32
        $region31: #{tpu_custom_call.1} parent=23 // pred_region
          %s170 = smul.u32 8, %s13
          %p171 = scmp.lt.s32.totalorder %s170, 31
          %s172 = scalar_select %p171, %s170, 31
          %s173 = smul.addr %s172, 2
          %s174 = smul.addr %s173, 8
          %s175 = scalar_lea.vmem %s1, %s174
          %s176 = smul.u32 8, %s13
        $region32: #{tpu_custom_call.1} parent=23 // pred_fallthru
          _
      $region24: #{tpu_custom_call.1} parent=5 // pred_fallthru
        _
      %p177 = scmp.le.s32.totalorder 1, %s13
      %p178 = scmp.lt.s32.totalorder %s13, 5
      %p179 = pnand %p177, %p178
      %p180 = pneg %p179
      // Predicated region
      $region33: #{tpu_custom_call.1} parent=5 // pred_check
        _
      $region34: #{tpu_custom_call.1} parent=5 // pred_check_branch
        %182 = sbr.rel (%p179) target = $region36
      $region35: #{tpu_custom_call.1} parent=5 // pred_region
        %s183 = ssub.s32 %s13, 1
        %s184 = smul.u32 8, %s18
        %p185 = scmp.lt.s32.totalorder %s184, 31
        %s186 = scalar_select %p185, %s184, 31
        %s187 = smul.addr %s186, 8
        %s188 = scalar_lea.vmem %s0, %s187
        %p189 = pneg %p39
        %p190 = pneg %p36
        %s191 = smul.u32 8, %s18
        %p192 = scmp.lt.s32.totalorder %s191, 31
        %s193 = scalar_select %p192, %s191, 31
        %s194 = smul.addr %s193, 2
        %s195 = smul.addr %s194, 8
        %s196 = scalar_lea.vmem %s1, %s195
        %p197 = pneg %p65
        %p198 = pneg %p62
        %p199 = pneg %p86
        %p200 = pneg %p83
        %p201 = pneg %p107
        %p202 = pneg %p104
        %p203 = pneg %p133
        %p204 = pneg %p130
        %s205 = sand.u32 %s120, 1
        %s206 = scalar_lea.sflag [#allocation3], %s205
        %s207 = sand.u32 %s120, 1
        %s208 = smul.addr %s207, 128
        %s209 = scalar_lea.vmem [#allocation2], %s208
        %s210 = smul.u32 8, %s18
        %p211 = scmp.lt.s32.totalorder %s210, 31
        %s212 = scalar_select %p211, %s210, 31
        %s213 = smul.addr %s212, 8
        %s214 = scalar_lea.vmem %s0, %s213
        %s215 = smul.u32 8, %s18
        %s216 = smul.u32 8, %s18
        %p217 = scmp.lt.s32.totalorder %s216, 31
        %s218 = scalar_select %p217, %s216, 31
        %s219 = smul.addr %s218, 2
        %s220 = smul.addr %s219, 8
        %s221 = scalar_lea.vmem %s1, %s220
        %s222 = smul.u32 8, %s18
        %s223 = smul.u32 8, %s18
        %v224 = vld [vmem:[%s214] sm:$0xff]
        %v225 = vld [vmem:[%s214 + $0x8] sm:$0xff]
        %v226 = vld [vmem:[%s214 + $0x10] sm:$0xff]
        %v227 = vld [vmem:[%s214 + $0x18] sm:$0xff]
        %v228 = vld [vmem:[%s214 + $0x20] sm:$0xff]
        %v229 = vld [vmem:[%s214 + $0x28] sm:$0xff]
        %v230 = vld [vmem:[%s214 + $0x30] sm:$0xff]
        %v231 = vld [vmem:[%s214 + $0x38] sm:$0xff]
        %v232 = vld [vmem:[%s221] sm:$0xff]
        %v233 = vld [vmem:[%s221 + $0x8] sm:$0xff]
        %v234 = vld [vmem:[%s221 + $0x10] sm:$0xff]
        %v235 = vld [vmem:[%s221 + $0x18] sm:$0xff]
        %v236 = vld [vmem:[%s221 + $0x20] sm:$0xff]
        %v237 = vld [vmem:[%s221 + $0x28] sm:$0xff]
        %v238 = vld [vmem:[%s221 + $0x30] sm:$0xff]
        %v239 = vld [vmem:[%s221 + $0x38] sm:$0xff]
        %v240 = vld [vmem:[%s221 + $0x40] sm:$0xff]
        %v241 = vld [vmem:[%s221 + $0x48] sm:$0xff]
        %v242 = vld [vmem:[%s221 + $0x50] sm:$0xff]
        %v243 = vld [vmem:[%s221 + $0x58] sm:$0xff]
        %v244 = vld [vmem:[%s221 + $0x60] sm:$0xff]
        %v245 = vld [vmem:[%s221 + $0x68] sm:$0xff]
        %v246 = vld [vmem:[%s221 + $0x70] sm:$0xff]
        %v247 = vld [vmem:[%s221 + $0x78] sm:$0xff]
        %v248 = vld [vmem:[%s2] sm:$0xff]
        %v249 = vld [vmem:[%s2 + $0x8] sm:$0x1]
        %v250 = vld [vmem:[%s2 + $0x10] sm:$0xff]
        %v251 = vld [vmem:[%s2 + $0x18] sm:$0xff]
        %v252 = vld [vmem:[%s2 + $0x20] sm:$0xff]
        %v253 = vld [vmem:[%s2 + $0x28] sm:$0xff]
        %v254 = vld [vmem:[%s2 + $0x30] sm:$0xff]
        %v255 = vld [vmem:[%s2 + $0x38] sm:$0xff]
        %v256 = vld [vmem:[%s2 + $0x40] sm:$0xff]
        %v257 = vld [vmem:[%s2 + $0x48] sm:$0xff]
        %v258 = vld [vmem:[%s2 + $0x50] sm:$0xff]
        %v259 = vld [vmem:[%s2 + $0x58] sm:$0xff]
        %v260 = vld [vmem:[%s2 + $0x60] sm:$0xff]
        %v261 = vld [vmem:[%s2 + $0x68] sm:$0xff]
        %v262 = vld [vmem:[%s2 + $0x70] sm:$0xff]
        %v263 = vld [vmem:[%s2 + $0x78] sm:$0xff]
        %v264 = vld [vmem:[%s2 + $0x80] sm:$0xff]
        %v265 = vld [vmem:[%s2 + $0x88] sm:$0xff]
        %v266 = vld [vmem:[%s2 + $0x90] sm:$0x1]
        %v267 = vld [vmem:[%s2 + $0x98] sm:$0xff]
        %v268 = vld [vmem:[%s2 + $0xa0] sm:$0xff]
        %v269 = vld [vmem:[%s2 + $0xa8] sm:$0xff]
        %v270 = vld [vmem:[%s2 + $0xb0] sm:$0xff]
        %v271 = vld [vmem:[%s2 + $0xb8] sm:$0xff]
        %v272 = vld [vmem:[%s2 + $0xc0] sm:$0xff]
        %v273 = vld [vmem:[%s2 + $0xc8] sm:$0xff]
        %v274 = vld [vmem:[%s2 + $0xd0] sm:$0xff]
        %v275 = vld [vmem:[%s2 + $0xd8] sm:$0xff]
        %v276 = vld [vmem:[%s2 + $0xe0] sm:$0xff]
        %v277 = vld [vmem:[%s2 + $0xe8] sm:$0xff]
        %v278 = vld [vmem:[%s2 + $0xf0] sm:$0xff]
        %v279 = vld [vmem:[%s2 + $0xf8] sm:$0xff]
        %v280 = vld [vmem:[%s2 + $0x100] sm:$0xff]
        %v281 = vld [vmem:[%s2 + $0x108] sm:$0xff]
        %v282 = vld [vmem:[%s2 + $0x110] sm:$0xff]
        %v283 = vld [vmem:[%s2 + $0x118] sm:$0x1]
        %v284 = vperm.slane %v249, 0
        %vm285 = vcmask 64512
        %v287 = vsel %vm285, %v224, 0
        %v290 = vsel %vm285, %v225, 0
        %v293 = vsel %vm285, %v226, 0
        %v296 = vsel %vm285, %v227, 0
        %v299 = vsel %vm285, %v228, 0
        %v302 = vsel %vm285, %v229, 0
        %v305 = vsel %vm285, %v230, 0
        %v308 = vsel %vm285, %v231, 0
        %310 = vmatpush.msra.mxu0 0.0
        %311 = vmatpush.msra.mxu0 0.0
        %312 = vmatpush.msra.mxu0 0.0
        %313 = vmatpush.msra.mxu0 0.0
        %314 = vmatpush.msra.mxu0 0.0
        %315 = vmatpush.msra.mxu0 0.0
        %316 = vmatpush.msra.mxu0 0.0
        %317 = vmatpush.msra.mxu0 0.0
        %318 = vmatpush.msra.mxu0 0.0
        %319 = vmatpush.msra.mxu0 0.0
        %320 = vmatpush.msra.mxu0 0.0
        %321 = vmatpush.msra.mxu0 0.0
        %322 = vmatpush.msra.mxu0 0.0
        %323 = vmatpush.msra.mxu0 0.0
        %324 = vmatpush.msra.mxu0 0.0
        %325 = vmatpush.msra.mxu0 %v248
        %326 = vmatmul.f32.gmra.mxu0 %v287
        %v327 = vpop.f32.mrf.mxu0
        %v328 = vadd.f32 %v284, %v327
        %329 = vmatmul.f32.gmra.mxu0 %v290
        %v330 = vpop.f32.mrf.mxu0
        %v331 = vadd.f32 %v284, %v330
        %332 = vmatmul.f32.gmra.mxu0 %v293
        %v333 = vpop.f32.mrf.mxu0
        %v334 = vadd.f32 %v284, %v333
        %335 = vmatmul.f32.gmra.mxu0 %v296
        %v336 = vpop.f32.mrf.mxu0
        %v337 = vadd.f32 %v284, %v336
        %338 = vmatmul.f32.gmra.mxu0 %v299
        %v339 = vpop.f32.mrf.mxu0
        %v340 = vadd.f32 %v284, %v339
        %341 = vmatmul.f32.gmra.mxu0 %v302
        %v342 = vpop.f32.mrf.mxu0
        %v343 = vadd.f32 %v284, %v342
        %344 = vmatmul.f32.gmra.mxu0 %v305
        %v345 = vpop.f32.mrf.mxu0
        %v346 = vadd.f32 %v284, %v345
        %347 = vmatmul.f32.gmra.mxu0 %v308
        %v348 = vpop.f32.mrf.mxu0
        %v349 = vadd.f32 %v284, %v348
        %350 = vdwg.mxu0
        %v351 = vmax.f32 %v328, 0.0
        %v352 = vmax.f32 %v331, 0.0
        %v353 = vmax.f32 %v334, 0.0
        %v354 = vmax.f32 %v337, 0.0
        %v355 = vmax.f32 %v340, 0.0
        %v356 = vmax.f32 %v343, 0.0
        %v357 = vmax.f32 %v346, 0.0
        %v358 = vmax.f32 %v349, 0.0
        %v359 = vperm.slane %v266, 0
        %360 = vmatpush.msra.mxu0 %v265
        %361 = vmatpush.msra.mxu0 %v264
        %362 = vmatpush.msra.mxu0 %v263
        %363 = vmatpush.msra.mxu0 %v262
        %364 = vmatpush.msra.mxu0 %v261
        %365 = vmatpush.msra.mxu0 %v260
        %366 = vmatpush.msra.mxu0 %v259
        %367 = vmatpush.msra.mxu0 %v258
        %368 = vmatpush.msra.mxu0 %v257
        %369 = vmatpush.msra.mxu0 %v256
        %370 = vmatpush.msra.mxu0 %v255
        %371 = vmatpush.msra.mxu0 %v254
        %372 = vmatpush.msra.mxu0 %v253
        %373 = vmatpush.msra.mxu0 %v252
        %374 = vmatpush.msra.mxu0 %v251
        %375 = vmatpush.msra.mxu0 %v250
        %376 = vmatmul.f32.gmra.mxu0 %v351
        %v377 = vpop.f32.mrf.mxu0
        %v378 = vadd.f32 %v359, %v377
        %379 = vmatmul.f32.gmra.mxu0 %v352
        %v380 = vpop.f32.mrf.mxu0
        %v381 = vadd.f32 %v359, %v380
        %382 = vmatmul.f32.gmra.mxu0 %v353
        %v383 = vpop.f32.mrf.mxu0
        %v384 = vadd.f32 %v359, %v383
        %385 = vmatmul.f32.gmra.mxu0 %v354
        %v386 = vpop.f32.mrf.mxu0
        %v387 = vadd.f32 %v359, %v386
        %388 = vmatmul.f32.gmra.mxu0 %v355
        %v389 = vpop.f32.mrf.mxu0
        %v390 = vadd.f32 %v359, %v389
        %391 = vmatmul.f32.gmra.mxu0 %v356
        %v392 = vpop.f32.mrf.mxu0
        %v393 = vadd.f32 %v359, %v392
        %394 = vmatmul.f32.gmra.mxu0 %v357
        %v395 = vpop.f32.mrf.mxu0
        %v396 = vadd.f32 %v359, %v395
        %397 = vmatmul.f32.gmra.mxu0 %v358
        %v398 = vpop.f32.mrf.mxu0
        %v399 = vadd.f32 %v359, %v398
        %400 = vdwg.mxu0
        %v401 = vmax.f32 %v378, 0.0
        %v402 = vmax.f32 %v381, 0.0
        %v403 = vmax.f32 %v384, 0.0
        %v404 = vmax.f32 %v387, 0.0
        %v405 = vmax.f32 %v390, 0.0
        %v406 = vmax.f32 %v393, 0.0
        %v407 = vmax.f32 %v396, 0.0
        %v408 = vmax.f32 %v399, 0.0
        %v409 = vperm.slane %v283, 0
        %410 = vmatpush.msra.mxu0 %v282
        %411 = vmatpush.msra.mxu0 %v281
        %412 = vmatpush.msra.mxu0 %v280
        %413 = vmatpush.msra.mxu0 %v279
        %414 = vmatpush.msra.mxu0 %v278
        %415 = vmatpush.msra.mxu0 %v277
        %416 = vmatpush.msra.mxu0 %v276
        %417 = vmatpush.msra.mxu0 %v275
        %418 = vmatpush.msra.mxu0 %v274
        %419 = vmatpush.msra.mxu0 %v273
        %420 = vmatpush.msra.mxu0 %v272
        %421 = vmatpush.msra.mxu0 %v271
        %422 = vmatpush.msra.mxu0 %v270
        %423 = vmatpush.msra.mxu0 %v269
        %424 = vmatpush.msra.mxu0 %v268
        %425 = vmatpush.msra.mxu0 %v267
        %426 = vmatmul.f32.gmra.mxu0 %v401
        %v427 = vpop.f32.mrf.mxu0
        %v428 = vadd.f32 %v409, %v427
        %429 = vmatmul.f32.gmra.mxu0 %v402
        %v430 = vpop.f32.mrf.mxu0
        %v431 = vadd.f32 %v409, %v430
        %432 = vmatmul.f32.gmra.mxu0 %v403
        %v433 = vpop.f32.mrf.mxu0
        %v434 = vadd.f32 %v409, %v433
        %435 = vmatmul.f32.gmra.mxu0 %v404
        %v436 = vpop.f32.mrf.mxu0
        %v437 = vadd.f32 %v409, %v436
        %438 = vmatmul.f32.gmra.mxu0 %v405
        %v439 = vpop.f32.mrf.mxu0
        %v440 = vadd.f32 %v409, %v439
        %441 = vmatmul.f32.gmra.mxu0 %v406
        %v442 = vpop.f32.mrf.mxu0
        %v443 = vadd.f32 %v409, %v442
        %444 = vmatmul.f32.gmra.mxu0 %v407
        %v445 = vpop.f32.mrf.mxu0
        %v446 = vadd.f32 %v409, %v445
        %447 = vmatmul.f32.gmra.mxu0 %v408
        %v448 = vpop.f32.mrf.mxu0
        %v449 = vadd.f32 %v409, %v448
        %450 = vdwg.mxu0
        %v451 = vrot.slane %v428, 4
        %v452 = vadd.f32 %v428, %v451
        %v453 = vrot.slane %v452, 2
        %v454 = vadd.f32 %v452, %v453
        %v455 = vrot.slane %v454, 1
        %v456 = vadd.f32 %v454, %v455
        %v457 = vrot.slane %v431, 4
        %v458 = vadd.f32 %v431, %v457
        %v459 = vrot.slane %v458, 2
        %v460 = vadd.f32 %v458, %v459
        %v461 = vrot.slane %v460, 1
        %v462 = vadd.f32 %v460, %v461
        %v463 = vrot.slane %v434, 4
        %v464 = vadd.f32 %v434, %v463
        %v465 = vrot.slane %v464, 2
        %v466 = vadd.f32 %v464, %v465
        %v467 = vrot.slane %v466, 1
        %v468 = vadd.f32 %v466, %v467
        %v469 = vrot.slane %v437, 4
        %v470 = vadd.f32 %v437, %v469
        %v471 = vrot.slane %v470, 2
        %v472 = vadd.f32 %v470, %v471
        %v473 = vrot.slane %v472, 1
        %v474 = vadd.f32 %v472, %v473
        %v475 = vrot.slane %v440, 4
        %v476 = vadd.f32 %v440, %v475
        %v477 = vrot.slane %v476, 2
        %v478 = vadd.f32 %v476, %v477
        %v479 = vrot.slane %v478, 1
        %v480 = vadd.f32 %v478, %v479
        %v481 = vrot.slane %v443, 4
        %v482 = vadd.f32 %v443, %v481
        %v483 = vrot.slane %v482, 2
        %v484 = vadd.f32 %v482, %v483
        %v485 = vrot.slane %v484, 1
        %v486 = vadd.f32 %v484, %v485
        %v487 = vrot.slane %v446, 4
        %v488 = vadd.f32 %v446, %v487
        %v489 = vrot.slane %v488, 2
        %v490 = vadd.f32 %v488, %v489
        %v491 = vrot.slane %v490, 1
        %v492 = vadd.f32 %v490, %v491
        %v493 = vrot.slane %v449, 4
        %v494 = vadd.f32 %v449, %v493
        %v495 = vrot.slane %v494, 2
        %v496 = vadd.f32 %v494, %v495
        %v497 = vrot.slane %v496, 1
        %v498 = vadd.f32 %v496, %v497
        %v499 = vmul.f32 %v456, 0.125
        %v500 = vmul.f32 %v462, 0.125
        %v501 = vmul.f32 %v468, 0.125
        %v502 = vmul.f32 %v474, 0.125
        %v503 = vmul.f32 %v480, 0.125
        %v504 = vmul.f32 %v486, 0.125
        %v505 = vmul.f32 %v492, 0.125
        %v506 = vmul.f32 %v498, 0.125
        %v507 = vld [vmem:[%s3] sm:$0xff]
        %v508 = vld [vmem:[%s3 + $0x8] sm:$0xff]
        %v509 = vld [vmem:[%s3 + $0x10] sm:$0xff]
        %v510 = vld [vmem:[%s3 + $0x18] sm:$0xff]
        %v511 = vld [vmem:[%s3 + $0x20] sm:$0xff]
        %v512 = vld [vmem:[%s3 + $0x28] sm:$0xff]
        %v513 = vld [vmem:[%s3 + $0x30] sm:$0xff]
        %v514 = vld [vmem:[%s3 + $0x38] sm:$0xff]
        %v515 = vld [vmem:[%s3 + $0x40] sm:$0xff]
        %v516 = vld [vmem:[%s3 + $0x48] sm:$0xff]
        %v517 = vld [vmem:[%s3 + $0x50] sm:$0xff]
        %v518 = vld [vmem:[%s3 + $0x58] sm:$0xff]
        %v519 = vld [vmem:[%s3 + $0x60] sm:$0xff]
        %v520 = vld [vmem:[%s3 + $0x68] sm:$0xff]
        %v521 = vld [vmem:[%s3 + $0x70] sm:$0xff]
        %v522 = vld [vmem:[%s3 + $0x78] sm:$0xff]
        %v523 = vld [vmem:[%s3 + $0x80] sm:$0xff]
        %v524 = vld [vmem:[%s3 + $0x88] sm:$0x1]
        %v525 = vld [vmem:[%s3 + $0x90] sm:$0xff]
        %v526 = vld [vmem:[%s3 + $0x98] sm:$0xff]
        %v527 = vld [vmem:[%s3 + $0xa0] sm:$0xff]
        %v528 = vld [vmem:[%s3 + $0xa8] sm:$0xff]
        %v529 = vld [vmem:[%s3 + $0xb0] sm:$0xff]
        %v530 = vld [vmem:[%s3 + $0xb8] sm:$0xff]
        %v531 = vld [vmem:[%s3 + $0xc0] sm:$0xff]
        %v532 = vld [vmem:[%s3 + $0xc8] sm:$0xff]
        %v533 = vld [vmem:[%s3 + $0xd0] sm:$0xff]
        %v534 = vld [vmem:[%s3 + $0xd8] sm:$0xff]
        %v535 = vld [vmem:[%s3 + $0xe0] sm:$0xff]
        %v536 = vld [vmem:[%s3 + $0xe8] sm:$0xff]
        %v537 = vld [vmem:[%s3 + $0xf0] sm:$0xff]
        %v538 = vld [vmem:[%s3 + $0xf8] sm:$0xff]
        %v539 = vld [vmem:[%s3 + $0x100] sm:$0xff]
        %v540 = vld [vmem:[%s3 + $0x108] sm:$0xff]
        %v541 = vld [vmem:[%s3 + $0x110] sm:$0x1]
        %v542 = vld [vmem:[%s3 + $0x118] sm:$0xff]
        %v543 = vld [vmem:[%s3 + $0x120] sm:$0xff]
        %v544 = vld [vmem:[%s3 + $0x128] sm:$0xff]
        %v545 = vld [vmem:[%s3 + $0x130] sm:$0xff]
        %v546 = vld [vmem:[%s3 + $0x138] sm:$0xff]
        %v547 = vld [vmem:[%s3 + $0x140] sm:$0xff]
        %v548 = vld [vmem:[%s3 + $0x148] sm:$0xff]
        %v549 = vld [vmem:[%s3 + $0x150] sm:$0xff]
        %v550 = vld [vmem:[%s3 + $0x158] sm:$0xff]
        %v551 = vld [vmem:[%s3 + $0x160] sm:$0xff]
        %v552 = vld [vmem:[%s3 + $0x168] sm:$0xff]
        %v553 = vld [vmem:[%s3 + $0x170] sm:$0xff]
        %v554 = vld [vmem:[%s3 + $0x178] sm:$0xff]
        %v555 = vld [vmem:[%s3 + $0x180] sm:$0xff]
        %v556 = vld [vmem:[%s3 + $0x188] sm:$0xff]
        %v557 = vld [vmem:[%s3 + $0x190] sm:$0xff]
        %v558 = vld [vmem:[%s3 + $0x198] sm:$0x1]
        %v560 = vsel %vm285, %v232, 0
        %v563 = vsel %vm285, %v233, 0
        %v566 = vsel %vm285, %v234, 0
        %v569 = vsel %vm285, %v235, 0
        %v572 = vsel %vm285, %v236, 0
        %v575 = vsel %vm285, %v237, 0
        %v578 = vsel %vm285, %v238, 0
        %v581 = vsel %vm285, %v239, 0
        %v584 = vsel %vm285, %v240, 0
        %v587 = vsel %vm285, %v241, 0
        %v590 = vsel %vm285, %v242, 0
        %v593 = vsel %vm285, %v243, 0
        %v596 = vsel %vm285, %v244, 0
        %v599 = vsel %vm285, %v245, 0
        %v602 = vsel %vm285, %v246, 0
        %v605 = vsel %vm285, %v247, 0
        %607 = vmatpush.msra.mxu0 0.0
        %608 = vmatpush.msra.mxu0 0.0
        %609 = vmatpush.msra.mxu0 0.0
        %610 = vmatpush.msra.mxu0 0.0
        %611 = vmatpush.msra.mxu0 0.0
        %612 = vmatpush.msra.mxu0 0.0
        %613 = vmatpush.msra.mxu0 0.0
        %614 = vmatpush.msra.mxu0 0.0
        %615 = vmatpush.msra.mxu0 0.0
        %616 = vmatpush.msra.mxu0 0.0
        %617 = vmatpush.msra.mxu0 0.0
        %618 = vmatpush.msra.mxu0 0.0
        %619 = vmatpush.msra.mxu0 0.0
        %620 = vmatpush.msra.mxu0 0.0
        %621 = vmatpush.msra.mxu0 0.0
        %622 = vmatpush.msra.mxu0 %v507
        %623 = vmatmul.f32.gmra.mxu0 %v560
        %v624 = vpop.f32.mrf.mxu0
        %v625 = vadd.f32 0.0, %v624
        %626 = vmatmul.f32.gmra.mxu0 %v563
        %v627 = vpop.f32.mrf.mxu0
        %v628 = vadd.f32 0.0, %v627
        %629 = vmatmul.f32.gmra.mxu0 %v566
        %v630 = vpop.f32.mrf.mxu0
        %v631 = vadd.f32 0.0, %v630
        %632 = vmatmul.f32.gmra.mxu0 %v569
        %v633 = vpop.f32.mrf.mxu0
        %v634 = vadd.f32 0.0, %v633
        %635 = vmatmul.f32.gmra.mxu0 %v572
        %v636 = vpop.f32.mrf.mxu0
        %v637 = vadd.f32 0.0, %v636
        %638 = vmatmul.f32.gmra.mxu0 %v575
        %v639 = vpop.f32.mrf.mxu0
        %v640 = vadd.f32 0.0, %v639
        %641 = vmatmul.f32.gmra.mxu0 %v578
        %v642 = vpop.f32.mrf.mxu0
        %v643 = vadd.f32 0.0, %v642
        %644 = vmatmul.f32.gmra.mxu0 %v581
        %v645 = vpop.f32.mrf.mxu0
        %v646 = vadd.f32 0.0, %v645
        %647 = vmatmul.f32.gmra.mxu0 %v584
        %v648 = vpop.f32.mrf.mxu0
        %v649 = vadd.f32 0.0, %v648
        %650 = vmatmul.f32.gmra.mxu0 %v587
        %v651 = vpop.f32.mrf.mxu0
        %v652 = vadd.f32 0.0, %v651
        %653 = vmatmul.f32.gmra.mxu0 %v590
        %v654 = vpop.f32.mrf.mxu0
        %v655 = vadd.f32 0.0, %v654
        %656 = vmatmul.f32.gmra.mxu0 %v593
        %v657 = vpop.f32.mrf.mxu0
        %v658 = vadd.f32 0.0, %v657
        %659 = vmatmul.f32.gmra.mxu0 %v596
        %v660 = vpop.f32.mrf.mxu0
        %v661 = vadd.f32 0.0, %v660
        %662 = vmatmul.f32.gmra.mxu0 %v599
        %v663 = vpop.f32.mrf.mxu0
        %v664 = vadd.f32 0.0, %v663
        %665 = vmatmul.f32.gmra.mxu0 %v602
        %v666 = vpop.f32.mrf.mxu0
        %v667 = vadd.f32 0.0, %v666
        %668 = vmatmul.f32.gmra.mxu0 %v605
        %v669 = vpop.f32.mrf.mxu0
        %v670 = vadd.f32 0.0, %v669
        %671 = vdwg.mxu0
        %vm680 = vcmask 1041409
        %v681 = vsel %vm680, %v500, %v499
        %vm682 = vcmask 1042434
        %v683 = vsel %vm682, %v501, %v681
        %vm684 = vcmask 1043459
        %v685 = vsel %vm684, %v502, %v683
        %vm686 = vcmask 1044484
        %v687 = vsel %vm686, %v503, %v685
        %vm688 = vcmask 1045509
        %v689 = vsel %vm688, %v504, %v687
        %vm690 = vcmask 1046534
        %v691 = vsel %vm690, %v505, %v689
        %vm692 = vcmask 1047559
        %v693 = vsel %vm692, %v506, %v691
        %695 = vmatpush.msra.mxu0 %v523
        %696 = vmatpush.msra.mxu0 %v522
        %697 = vmatpush.msra.mxu0 %v521
        %698 = vmatpush.msra.mxu0 %v520
        %699 = vmatpush.msra.mxu0 %v519
        %700 = vmatpush.msra.mxu0 %v518
        %701 = vmatpush.msra.mxu0 %v517
        %702 = vmatpush.msra.mxu0 %v516
        %703 = vmatpush.msra.mxu0 %v515
        %704 = vmatpush.msra.mxu0 %v514
        %705 = vmatpush.msra.mxu0 %v513
        %706 = vmatpush.msra.mxu0 %v512
        %707 = vmatpush.msra.mxu0 %v511
        %708 = vmatpush.msra.mxu0 %v510
        %709 = vmatpush.msra.mxu0 %v509
        %710 = vmatpush.msra.mxu0 %v508
        %711 = vmatmul.f32.gmra.mxu0 %v693
        %v712 = vpop.f32.mrf.mxu0
        %v713 = vadd.f32 0.0, %v712
        %714 = vdwg.mxu0
        %v716 = vrot.slane %v713, 1
        %v717 = vrot.slane %v713, 2
        %v718 = vrot.slane %v713, 3
        %v719 = vrot.slane %v713, 4
        %v720 = vrot.slane %v713, 5
        %v721 = vrot.slane %v713, 6
        %v722 = vrot.slane %v713, 7
        %v723 = vperm.slane %v713, 0
        %v724 = vperm.slane %v716, 0
        %v725 = vperm.slane %v717, 0
        %v726 = vperm.slane %v718, 0
        %v727 = vperm.slane %v719, 0
        %v728 = vperm.slane %v720, 0
        %v729 = vperm.slane %v721, 0
        %v730 = vperm.slane %v722, 0
        %v739 = vadd.f32 %v625, %v723
        %v740 = vadd.f32 %v628, %v723
        %v741 = vadd.f32 %v631, %v724
        %v742 = vadd.f32 %v634, %v724
        %v743 = vadd.f32 %v637, %v725
        %v744 = vadd.f32 %v640, %v725
        %v745 = vadd.f32 %v643, %v726
        %v746 = vadd.f32 %v646, %v726
        %v747 = vadd.f32 %v649, %v727
        %v748 = vadd.f32 %v652, %v727
        %v749 = vadd.f32 %v655, %v728
        %v750 = vadd.f32 %v658, %v728
        %v751 = vadd.f32 %v661, %v729
        %v752 = vadd.f32 %v664, %v729
        %v753 = vadd.f32 %v667, %v730
        %v754 = vadd.f32 %v670, %v730
        %v755 = vperm.slane %v524, 0
        %v756 = vadd.f32 %v739, %v755
        %v757 = vadd.f32 %v740, %v755
        %v758 = vadd.f32 %v741, %v755
        %v759 = vadd.f32 %v742, %v755
        %v760 = vadd.f32 %v743, %v755
        %v761 = vadd.f32 %v744, %v755
        %v762 = vadd.f32 %v745, %v755
        %v763 = vadd.f32 %v746, %v755
        %v764 = vadd.f32 %v747, %v755
        %v765 = vadd.f32 %v748, %v755
        %v766 = vadd.f32 %v749, %v755
        %v767 = vadd.f32 %v750, %v755
        %v768 = vadd.f32 %v751, %v755
        %v769 = vadd.f32 %v752, %v755
        %v770 = vadd.f32 %v753, %v755
        %v771 = vadd.f32 %v754, %v755
        %v772 = vmax.f32 %v756, 0.0
        %v773 = vmax.f32 %v757, 0.0
        %v774 = vmax.f32 %v758, 0.0
        %v775 = vmax.f32 %v759, 0.0
        %v776 = vmax.f32 %v760, 0.0
        %v777 = vmax.f32 %v761, 0.0
        %v778 = vmax.f32 %v762, 0.0
        %v779 = vmax.f32 %v763, 0.0
        %v780 = vmax.f32 %v764, 0.0
        %v781 = vmax.f32 %v765, 0.0
        %v782 = vmax.f32 %v766, 0.0
        %v783 = vmax.f32 %v767, 0.0
        %v784 = vmax.f32 %v768, 0.0
        %v785 = vmax.f32 %v769, 0.0
        %v786 = vmax.f32 %v770, 0.0
        %v787 = vmax.f32 %v771, 0.0
        %v788 = vperm.slane %v541, 0
        %789 = vmatpush.msra.mxu0 %v540
        %790 = vmatpush.msra.mxu0 %v539
        %791 = vmatpush.msra.mxu0 %v538
        %792 = vmatpush.msra.mxu0 %v537
        %793 = vmatpush.msra.mxu0 %v536
        %794 = vmatpush.msra.mxu0 %v535
        %795 = vmatpush.msra.mxu0 %v534
        %796 = vmatpush.msra.mxu0 %v533
        %797 = vmatpush.msra.mxu0 %v532
        %798 = vmatpush.msra.mxu0 %v531
        %799 = vmatpush.msra.mxu0 %v530
        %800 = vmatpush.msra.mxu0 %v529
        %801 = vmatpush.msra.mxu0 %v528
        %802 = vmatpush.msra.mxu0 %v527
        %803 = vmatpush.msra.mxu0 %v526
        %804 = vmatpush.msra.mxu0 %v525
        %805 = vmatmul.f32.gmra.mxu0 %v772
        %v806 = vpop.f32.mrf.mxu0
        %v807 = vadd.f32 %v788, %v806
        %808 = vmatmul.f32.gmra.mxu0 %v773
        %v809 = vpop.f32.mrf.mxu0
        %v810 = vadd.f32 %v788, %v809
        %811 = vmatmul.f32.gmra.mxu0 %v774
        %v812 = vpop.f32.mrf.mxu0
        %v813 = vadd.f32 %v788, %v812
        %814 = vmatmul.f32.gmra.mxu0 %v775
        %v815 = vpop.f32.mrf.mxu0
        %v816 = vadd.f32 %v788, %v815
        %817 = vmatmul.f32.gmra.mxu0 %v776
        %v818 = vpop.f32.mrf.mxu0
        %v819 = vadd.f32 %v788, %v818
        %820 = vmatmul.f32.gmra.mxu0 %v777
        %v821 = vpop.f32.mrf.mxu0
        %v822 = vadd.f32 %v788, %v821
        %823 = vmatmul.f32.gmra.mxu0 %v778
        %v824 = vpop.f32.mrf.mxu0
        %v825 = vadd.f32 %v788, %v824
        %826 = vmatmul.f32.gmra.mxu0 %v779
        %v827 = vpop.f32.mrf.mxu0
        %v828 = vadd.f32 %v788, %v827
        %829 = vmatmul.f32.gmra.mxu0 %v780
        %v830 = vpop.f32.mrf.mxu0
        %v831 = vadd.f32 %v788, %v830
        %832 = vmatmul.f32.gmra.mxu0 %v781
        %v833 = vpop.f32.mrf.mxu0
        %v834 = vadd.f32 %v788, %v833
        %835 = vmatmul.f32.gmra.mxu0 %v782
        %v836 = vpop.f32.mrf.mxu0
        %v837 = vadd.f32 %v788, %v836
        %838 = vmatmul.f32.gmra.mxu0 %v783
        %v839 = vpop.f32.mrf.mxu0
        %v840 = vadd.f32 %v788, %v839
        %841 = vmatmul.f32.gmra.mxu0 %v784
        %v842 = vpop.f32.mrf.mxu0
        %v843 = vadd.f32 %v788, %v842
        %844 = vmatmul.f32.gmra.mxu0 %v785
        %v845 = vpop.f32.mrf.mxu0
        %v846 = vadd.f32 %v788, %v845
        %847 = vmatmul.f32.gmra.mxu0 %v786
        %v848 = vpop.f32.mrf.mxu0
        %v849 = vadd.f32 %v788, %v848
        %850 = vmatmul.f32.gmra.mxu0 %v787
        %v851 = vpop.f32.mrf.mxu0
        %v852 = vadd.f32 %v788, %v851
        %853 = vdwg.mxu0
        %v854 = vmax.f32 %v807, 0.0
        %v855 = vmax.f32 %v810, 0.0
        %v856 = vmax.f32 %v813, 0.0
        %v857 = vmax.f32 %v816, 0.0
        %v858 = vmax.f32 %v819, 0.0
        %v859 = vmax.f32 %v822, 0.0
        %v860 = vmax.f32 %v825, 0.0
        %v861 = vmax.f32 %v828, 0.0
        %v862 = vmax.f32 %v831, 0.0
        %v863 = vmax.f32 %v834, 0.0
        %v864 = vmax.f32 %v837, 0.0
        %v865 = vmax.f32 %v840, 0.0
        %v866 = vmax.f32 %v843, 0.0
        %v867 = vmax.f32 %v846, 0.0
        %v868 = vmax.f32 %v849, 0.0
        %v869 = vmax.f32 %v852, 0.0
        %v870 = vperm.slane %v558, 0
        %871 = vmatpush.msra.mxu0 %v557
        %872 = vmatpush.msra.mxu0 %v556
        %873 = vmatpush.msra.mxu0 %v555
        %874 = vmatpush.msra.mxu0 %v554
        %875 = vmatpush.msra.mxu0 %v553
        %876 = vmatpush.msra.mxu0 %v552
        %877 = vmatpush.msra.mxu0 %v551
        %878 = vmatpush.msra.mxu0 %v550
        %879 = vmatpush.msra.mxu0 %v549
        %880 = vmatpush.msra.mxu0 %v548
        %881 = vmatpush.msra.mxu0 %v547
        %882 = vmatpush.msra.mxu0 %v546
        %883 = vmatpush.msra.mxu0 %v545
        %884 = vmatpush.msra.mxu0 %v544
        %885 = vmatpush.msra.mxu0 %v543
        %886 = vmatpush.msra.mxu0 %v542
        %887 = vmatmul.f32.gmra.mxu0 %v854
        %v888 = vpop.f32.mrf.mxu0
        %v889 = vadd.f32 %v870, %v888
        %890 = vmatmul.f32.gmra.mxu0 %v855
        %v891 = vpop.f32.mrf.mxu0
        %v892 = vadd.f32 %v870, %v891
        %893 = vmatmul.f32.gmra.mxu0 %v856
        %v894 = vpop.f32.mrf.mxu0
        %v895 = vadd.f32 %v870, %v894
        %896 = vmatmul.f32.gmra.mxu0 %v857
        %v897 = vpop.f32.mrf.mxu0
        %v898 = vadd.f32 %v870, %v897
        %899 = vmatmul.f32.gmra.mxu0 %v858
        %v900 = vpop.f32.mrf.mxu0
        %v901 = vadd.f32 %v870, %v900
        %902 = vmatmul.f32.gmra.mxu0 %v859
        %v903 = vpop.f32.mrf.mxu0
        %v904 = vadd.f32 %v870, %v903
        %905 = vmatmul.f32.gmra.mxu0 %v860
        %v906 = vpop.f32.mrf.mxu0
        %v907 = vadd.f32 %v870, %v906
        %908 = vmatmul.f32.gmra.mxu0 %v861
        %v909 = vpop.f32.mrf.mxu0
        %v910 = vadd.f32 %v870, %v909
        %911 = vmatmul.f32.gmra.mxu0 %v862
        %v912 = vpop.f32.mrf.mxu0
        %v913 = vadd.f32 %v870, %v912
        %914 = vmatmul.f32.gmra.mxu0 %v863
        %v915 = vpop.f32.mrf.mxu0
        %v916 = vadd.f32 %v870, %v915
        %917 = vmatmul.f32.gmra.mxu0 %v864
        %v918 = vpop.f32.mrf.mxu0
        %v919 = vadd.f32 %v870, %v918
        %920 = vmatmul.f32.gmra.mxu0 %v865
        %v921 = vpop.f32.mrf.mxu0
        %v922 = vadd.f32 %v870, %v921
        %923 = vmatmul.f32.gmra.mxu0 %v866
        %v924 = vpop.f32.mrf.mxu0
        %v925 = vadd.f32 %v870, %v924
        %926 = vmatmul.f32.gmra.mxu0 %v867
        %v927 = vpop.f32.mrf.mxu0
        %v928 = vadd.f32 %v870, %v927
        %929 = vmatmul.f32.gmra.mxu0 %v868
        %v930 = vpop.f32.mrf.mxu0
        %v931 = vadd.f32 %v870, %v930
        %932 = vmatmul.f32.gmra.mxu0 %v869
        %v933 = vpop.f32.mrf.mxu0
        %v934 = vadd.f32 %v870, %v933
        %935 = vdwg.mxu0
        %v936 = vlaneseq
        %v937 = vand.u32 %v936, 127
        %v938 = vmax.f32 %v889, 0.0
        %v939 = vmax.f32 %v892, 0.0
        %v940 = vmax.f32 %v895, 0.0
        %v941 = vmax.f32 %v898, 0.0
        %v942 = vmax.f32 %v901, 0.0
        %v943 = vmax.f32 %v904, 0.0
        %v944 = vmax.f32 %v907, 0.0
        %v945 = vmax.f32 %v910, 0.0
        %v946 = vmax.f32 %v913, 0.0
        %v947 = vmax.f32 %v916, 0.0
        %v948 = vmax.f32 %v919, 0.0
        %v949 = vmax.f32 %v922, 0.0
        %v950 = vmax.f32 %v925, 0.0
        %v951 = vmax.f32 %v928, 0.0
        %v952 = vmax.f32 %v931, 0.0
        %v953 = vmax.f32 %v934, 0.0
        %v954 = vand.u32 2147483647, %v889
        %v955 = vand.u32 2147483647, %v892
        %v956 = vand.u32 2147483647, %v895
        %v957 = vand.u32 2147483647, %v898
        %v958 = vand.u32 2147483647, %v901
        %v959 = vand.u32 2147483647, %v904
        %v960 = vand.u32 2147483647, %v907
        %v961 = vand.u32 2147483647, %v910
        %v962 = vand.u32 2147483647, %v913
        %v963 = vand.u32 2147483647, %v916
        %v964 = vand.u32 2147483647, %v919
        %v965 = vand.u32 2147483647, %v922
        %v966 = vand.u32 2147483647, %v925
        %v967 = vand.u32 2147483647, %v928
        %v968 = vand.u32 2147483647, %v931
        %v969 = vand.u32 2147483647, %v934
        %v970 = vsub.f32 0.0, %v954
        %v971 = vsub.f32 0.0, %v955
        %v972 = vsub.f32 0.0, %v956
        %v973 = vsub.f32 0.0, %v957
        %v974 = vsub.f32 0.0, %v958
        %v975 = vsub.f32 0.0, %v959
        %v976 = vsub.f32 0.0, %v960
        %v977 = vsub.f32 0.0, %v961
        %v978 = vsub.f32 0.0, %v962
        %v979 = vsub.f32 0.0, %v963
        %v980 = vsub.f32 0.0, %v964
        %v981 = vsub.f32 0.0, %v965
        %v982 = vsub.f32 0.0, %v966
        %v983 = vsub.f32 0.0, %v967
        %v984 = vsub.f32 0.0, %v968
        %v985 = vsub.f32 0.0, %v969
        %v986 = vmul.f32 %v970, 1.442695
        %v987 = vpow.pop %v986
        %v988 = vmul.f32 %v971, 1.442695
        %v989 = vpow.pop %v988
        %v990 = vmul.f32 %v972, 1.442695
        %v991 = vpow.pop %v990
        %v992 = vmul.f32 %v973, 1.442695
        %v993 = vpow.pop %v992
        %v994 = vmul.f32 %v974, 1.442695
        %v995 = vpow.pop %v994
        %v996 = vmul.f32 %v975, 1.442695
        %v997 = vpow.pop %v996
        %v998 = vmul.f32 %v976, 1.442695
        %v999 = vpow.pop %v998
        %v1000 = vmul.f32 %v977, 1.442695
        %v1001 = vpow.pop %v1000
        %v1002 = vmul.f32 %v978, 1.442695
        %v1003 = vpow.pop %v1002
        %v1004 = vmul.f32 %v979, 1.442695
        %v1005 = vpow.pop %v1004
        %v1006 = vmul.f32 %v980, 1.442695
        %v1007 = vpow.pop %v1006
        %v1008 = vmul.f32 %v981, 1.442695
        %v1009 = vpow.pop %v1008
        %v1010 = vmul.f32 %v982, 1.442695
        %v1011 = vpow.pop %v1010
        %v1012 = vmul.f32 %v983, 1.442695
        %v1013 = vpow.pop %v1012
        %v1014 = vmul.f32 %v984, 1.442695
        %v1015 = vpow.pop %v1014
        %v1016 = vmul.f32 %v985, 1.442695
        %v1017 = vpow.pop %v1016
        %v1018 = vadd.f32 %v987, 1.0
        %v1019 = vlog2.pop %v1018
        %v1020 = vmul.f32 %v1019, 0.6931472
        %v1021 = vmul.f32 -0.5, %v987
        %v1022 = vadd.f32 %v1021, 1.0
        %v1023 = vmul.f32 %v1022, %v987
        %v1024 = vand.u32 2147483647, %v987
        %vm1025 = vcmp.lt.f32.partialorder %v1024, 0.0004427343
        %v1026 = vsel %vm1025, %v1023, %v1020
        %v1027 = vadd.f32 %v989, 1.0
        %v1028 = vlog2.pop %v1027
        %v1029 = vmul.f32 %v1028, 0.6931472
        %v1030 = vmul.f32 -0.5, %v989
        %v1031 = vadd.f32 %v1030, 1.0
        %v1032 = vmul.f32 %v1031, %v989
        %v1033 = vand.u32 2147483647, %v989
        %vm1034 = vcmp.lt.f32.partialorder %v1033, 0.0004427343
        %v1035 = vsel %vm1034, %v1032, %v1029
        %v1036 = vadd.f32 %v991, 1.0
        %v1037 = vlog2.pop %v1036
        %v1038 = vmul.f32 %v1037, 0.6931472
        %v1039 = vmul.f32 -0.5, %v991
        %v1040 = vadd.f32 %v1039, 1.0
        %v1041 = vmul.f32 %v1040, %v991
        %v1042 = vand.u32 2147483647, %v991
        %vm1043 = vcmp.lt.f32.partialorder %v1042, 0.0004427343
        %v1044 = vsel %vm1043, %v1041, %v1038
        %v1045 = vadd.f32 %v993, 1.0
        %v1046 = vlog2.pop %v1045
        %v1047 = vmul.f32 %v1046, 0.6931472
        %v1048 = vmul.f32 -0.5, %v993
        %v1049 = vadd.f32 %v1048, 1.0
        %v1050 = vmul.f32 %v1049, %v993
        %v1051 = vand.u32 2147483647, %v993
        %vm1052 = vcmp.lt.f32.partialorder %v1051, 0.0004427343
        %v1053 = vsel %vm1052, %v1050, %v1047
        %v1054 = vadd.f32 %v995, 1.0
        %v1055 = vlog2.pop %v1054
        %v1056 = vmul.f32 %v1055, 0.6931472
        %v1057 = vmul.f32 -0.5, %v995
        %v1058 = vadd.f32 %v1057, 1.0
        %v1059 = vmul.f32 %v1058, %v995
        %v1060 = vand.u32 2147483647, %v995
        %vm1061 = vcmp.lt.f32.partialorder %v1060, 0.0004427343
        %v1062 = vsel %vm1061, %v1059, %v1056
        %v1063 = vadd.f32 %v997, 1.0
        %v1064 = vlog2.pop %v1063
        %v1065 = vmul.f32 %v1064, 0.6931472
        %v1066 = vmul.f32 -0.5, %v997
        %v1067 = vadd.f32 %v1066, 1.0
        %v1068 = vmul.f32 %v1067, %v997
        %v1069 = vand.u32 2147483647, %v997
        %vm1070 = vcmp.lt.f32.partialorder %v1069, 0.0004427343
        %v1071 = vsel %vm1070, %v1068, %v1065
        %v1072 = vadd.f32 %v999, 1.0
        %v1073 = vlog2.pop %v1072
        %v1074 = vmul.f32 %v1073, 0.6931472
        %v1075 = vmul.f32 -0.5, %v999
        %v1076 = vadd.f32 %v1075, 1.0
        %v1077 = vmul.f32 %v1076, %v999
        %v1078 = vand.u32 2147483647, %v999
        %vm1079 = vcmp.lt.f32.partialorder %v1078, 0.0004427343
        %v1080 = vsel %vm1079, %v1077, %v1074
        %v1081 = vadd.f32 %v1001, 1.0
        %v1082 = vlog2.pop %v1081
        %v1083 = vmul.f32 %v1082, 0.6931472
        %v1084 = vmul.f32 -0.5, %v1001
        %v1085 = vadd.f32 %v1084, 1.0
        %v1086 = vmul.f32 %v1085, %v1001
        %v1087 = vand.u32 2147483647, %v1001
        %vm1088 = vcmp.lt.f32.partialorder %v1087, 0.0004427343
        %v1089 = vsel %vm1088, %v1086, %v1083
        %v1090 = vadd.f32 %v1003, 1.0
        %v1091 = vlog2.pop %v1090
        %v1092 = vmul.f32 %v1091, 0.6931472
        %v1093 = vmul.f32 -0.5, %v1003
        %v1094 = vadd.f32 %v1093, 1.0
        %v1095 = vmul.f32 %v1094, %v1003
        %v1096 = vand.u32 2147483647, %v1003
        %vm1097 = vcmp.lt.f32.partialorder %v1096, 0.0004427343
        %v1098 = vsel %vm1097, %v1095, %v1092
        %v1099 = vadd.f32 %v1005, 1.0
        %v1100 = vlog2.pop %v1099
        %v1101 = vmul.f32 %v1100, 0.6931472
        %v1102 = vmul.f32 -0.5, %v1005
        %v1103 = vadd.f32 %v1102, 1.0
        %v1104 = vmul.f32 %v1103, %v1005
        %v1105 = vand.u32 2147483647, %v1005
        %vm1106 = vcmp.lt.f32.partialorder %v1105, 0.0004427343
        %v1107 = vsel %vm1106, %v1104, %v1101
        %v1108 = vadd.f32 %v1007, 1.0
        %v1109 = vlog2.pop %v1108
        %v1110 = vmul.f32 %v1109, 0.6931472
        %v1111 = vmul.f32 -0.5, %v1007
        %v1112 = vadd.f32 %v1111, 1.0
        %v1113 = vmul.f32 %v1112, %v1007
        %v1114 = vand.u32 2147483647, %v1007
        %vm1115 = vcmp.lt.f32.partialorder %v1114, 0.0004427343
        %v1116 = vsel %vm1115, %v1113, %v1110
        %v1117 = vadd.f32 %v1009, 1.0
        %v1118 = vlog2.pop %v1117
        %v1119 = vmul.f32 %v1118, 0.6931472
        %v1120 = vmul.f32 -0.5, %v1009
        %v1121 = vadd.f32 %v1120, 1.0
        %v1122 = vmul.f32 %v1121, %v1009
        %v1123 = vand.u32 2147483647, %v1009
        %vm1124 = vcmp.lt.f32.partialorder %v1123, 0.0004427343
        %v1125 = vsel %vm1124, %v1122, %v1119
        %v1126 = vadd.f32 %v1011, 1.0
        %v1127 = vlog2.pop %v1126
        %v1128 = vmul.f32 %v1127, 0.6931472
        %v1129 = vmul.f32 -0.5, %v1011
        %v1130 = vadd.f32 %v1129, 1.0
        %v1131 = vmul.f32 %v1130, %v1011
        %v1132 = vand.u32 2147483647, %v1011
        %vm1133 = vcmp.lt.f32.partialorder %v1132, 0.0004427343
        %v1134 = vsel %vm1133, %v1131, %v1128
        %v1135 = vadd.f32 %v1013, 1.0
        %v1136 = vlog2.pop %v1135
        %v1137 = vmul.f32 %v1136, 0.6931472
        %v1138 = vmul.f32 -0.5, %v1013
        %v1139 = vadd.f32 %v1138, 1.0
        %v1140 = vmul.f32 %v1139, %v1013
        %v1141 = vand.u32 2147483647, %v1013
        %vm1142 = vcmp.lt.f32.partialorder %v1141, 0.0004427343
        %v1143 = vsel %vm1142, %v1140, %v1137
        %v1144 = vadd.f32 %v1015, 1.0
        %v1145 = vlog2.pop %v1144
        %v1146 = vmul.f32 %v1145, 0.6931472
        %v1147 = vmul.f32 -0.5, %v1015
        %v1148 = vadd.f32 %v1147, 1.0
        %v1149 = vmul.f32 %v1148, %v1015
        %v1150 = vand.u32 2147483647, %v1015
        %vm1151 = vcmp.lt.f32.partialorder %v1150, 0.0004427343
        %v1152 = vsel %vm1151, %v1149, %v1146
        %v1153 = vadd.f32 %v1017, 1.0
        %v1154 = vlog2.pop %v1153
        %v1155 = vmul.f32 %v1154, 0.6931472
        %v1156 = vmul.f32 -0.5, %v1017
        %v1157 = vadd.f32 %v1156, 1.0
        %v1158 = vmul.f32 %v1157, %v1017
        %v1159 = vand.u32 2147483647, %v1017
        %vm1160 = vcmp.lt.f32.partialorder %v1159, 0.0004427343
        %v1161 = vsel %vm1160, %v1158, %v1155
        %v1162 = vadd.f32 %v938, %v1026
        %v1163 = vadd.f32 %v939, %v1035
        %v1164 = vadd.f32 %v940, %v1044
        %v1165 = vadd.f32 %v941, %v1053
        %v1166 = vadd.f32 %v942, %v1062
        %v1167 = vadd.f32 %v943, %v1071
        %v1168 = vadd.f32 %v944, %v1080
        %v1169 = vadd.f32 %v945, %v1089
        %v1170 = vadd.f32 %v946, %v1098
        %v1171 = vadd.f32 %v947, %v1107
        %v1172 = vadd.f32 %v948, %v1116
        %v1173 = vadd.f32 %v949, %v1125
        %v1174 = vadd.f32 %v950, %v1134
        %v1175 = vadd.f32 %v951, %v1143
        %v1176 = vadd.f32 %v952, %v1152
        %v1177 = vadd.f32 %v953, %v1161
        %vm1178 = vcmp.lt.s32.totalorder %v937, 3
        %v1179 = vsel %vm1178, %v889, %v1162
        %v1180 = vsel %vm1178, %v892, %v1163
        %v1181 = vsel %vm1178, %v895, %v1164
        %v1182 = vsel %vm1178, %v898, %v1165
        %v1183 = vsel %vm1178, %v901, %v1166
        %v1184 = vsel %vm1178, %v904, %v1167
        %v1185 = vsel %vm1178, %v907, %v1168
        %v1186 = vsel %vm1178, %v910, %v1169
        %v1187 = vsel %vm1178, %v913, %v1170
        %v1188 = vsel %vm1178, %v916, %v1171
        %v1189 = vsel %vm1178, %v919, %v1172
        %v1190 = vsel %vm1178, %v922, %v1173
        %v1191 = vsel %vm1178, %v925, %v1174
        %v1192 = vsel %vm1178, %v928, %v1175
        %v1193 = vsel %vm1178, %v931, %v1176
        %v1194 = vsel %vm1178, %v934, %v1177
        %1195 = vst [vmem:[%s209] sm:$0xff] %v1179
        %1196 = vst [vmem:[%s209 + $0x8] sm:$0xff] %v1180
        %1197 = vst [vmem:[%s209 + $0x10] sm:$0xff] %v1181
        %1198 = vst [vmem:[%s209 + $0x18] sm:$0xff] %v1182
        %1199 = vst [vmem:[%s209 + $0x20] sm:$0xff] %v1183
        %1200 = vst [vmem:[%s209 + $0x28] sm:$0xff] %v1184
        %1201 = vst [vmem:[%s209 + $0x30] sm:$0xff] %v1185
        %1202 = vst [vmem:[%s209 + $0x38] sm:$0xff] %v1186
        %1203 = vst [vmem:[%s209 + $0x40] sm:$0xff] %v1187
        %1204 = vst [vmem:[%s209 + $0x48] sm:$0xff] %v1188
        %1205 = vst [vmem:[%s209 + $0x50] sm:$0xff] %v1189
        %1206 = vst [vmem:[%s209 + $0x58] sm:$0xff] %v1190
        %1207 = vst [vmem:[%s209 + $0x60] sm:$0xff] %v1191
        %1208 = vst [vmem:[%s209 + $0x68] sm:$0xff] %v1192
        %1209 = vst [vmem:[%s209 + $0x70] sm:$0xff] %v1193
        %1210 = vst [vmem:[%s209 + $0x78] sm:$0xff] %v1194
        %s1211 = sand.u32 %s120, 1
        %s1212 = scalar_lea.sflag [#allocation3], %s1211
        %s1213 = sand.u32 %s120, 1
        %s1214 = smul.addr %s1213, 128
        %s1215 = scalar_lea.vmem [#allocation2], %s1214
        // Predicated region
        $region37: #{tpu_custom_call.1} parent=35 // pred_check
          %p1216 = pneg %p130
        $region38: #{tpu_custom_call.1} parent=35 // pred_check_branch
          %1218 = sbr.rel (%p1216) target = $region40
        $region39: #{tpu_custom_call.1} parent=35 // pred_region
          %s1219 = smul.u32 8, %s18
          %1221 = vsyncadd %s1212, 0
          %s1222 = smul.addr %s1219, 2
          %s1223 = smul.addr %s1222, 8
          %s1224 = scalar_lea.hbm %s4, %s1223
          %s1225 = sshll.u32 %s1215, 4
          %s1226 = int_to_ptr.vmem [resolvable:$true] %s1225
          %s1227 = sshll.u32 %s1224, 4
          %s1228 = int_to_ptr.hbm [resolvable:$true] %s1227
          %1233 = dma.vmem_to_hbm [thread:$0]  %s1226, 2048, %s1228, %s1212, 128, 128, 8
        $region40: #{tpu_custom_call.1} parent=35 // pred_fallthru
          _
      $region36: #{tpu_custom_call.1} parent=5 // pred_fallthru
        _
      %p1234 = scmp.le.s32.totalorder 2, %s13
      // Predicated region
      $region41: #{tpu_custom_call.1} parent=5 // pred_check
        %p1235 = pneg %p1234
      $region42: #{tpu_custom_call.1} parent=5 // pred_check_branch
        %1237 = sbr.rel (%p1235) target = $region44
      $region43: #{tpu_custom_call.1} parent=5 // pred_region
        %s1238 = ssub.s32 %s13, 2
        // Predicated region
        $region45: #{tpu_custom_call.1} parent=43 // pred_check
          %p1239 = pneg %p136
        $region46: #{tpu_custom_call.1} parent=43 // pred_check_branch
          %1241 = sbr.rel (%p1239) target = $region48
        $region47: #{tpu_custom_call.1} parent=43 // pred_region
          %s1242 = sand.u32 %s121, 1
          %s1243 = scalar_lea.sflag [#allocation3], %s1242
          %s1244 = sand.u32 %s121, 1
          %s1245 = smul.addr %s1244, 128
          %s1246 = scalar_lea.vmem [#allocation2], %s1245
          %1248 = dma.done %s1243, 2048
        $region48: #{tpu_custom_call.1} parent=43 // pred_fallthru
          _
      $region44: #{tpu_custom_call.1} parent=5 // pred_fallthru
        _
    $region6: #{tpu_custom_call.1} parent=1 // loop_footer
      %s17 = sadd.s32 1, %s13
    $region7: #{tpu_custom_call.1} parent=1 // loop_footer_branch
      %12 = sbr.rel target = $region3
    $region8: #{tpu_custom_call.1} parent=1 // loop_exit
      _
    %1249 = vsyncpa [#allocation3], 1
    %s1250 = scalar_lea.sflag [#allocation3], 1
    %1251 = vsyncpa %s1250, 1

</llo_original>
